<compile_context>
chip_gen: v5e
topology: v5e:2x2
jax: 0.10.0
libtpu: 0.0.40
codegen_flags: <defaults>
</compile_context>

<pallas_src>
import functools

import jax
import jax.numpy as jnp
from jax.experimental import pallas as pl
from jax.experimental.pallas import tpu as pltpu

LANES = 128
SUBLANES = 8


def _resolution_loss_kernel(x_ref, y_ref, o_ref, *, tile_rows, rows,
                            steps_per_split, apply_mask):
    c = pl.program_id(0)   # megacore split (parallel)
    i = pl.program_id(1)   # reduction steps within the split (arbitrary)

    # Zero this split's resident (8,128) accumulator block on its first step.
    @pl.when(i == 0)
    def _():
        o_ref[...] = jnp.zeros_like(o_ref)

    x = x_ref[...].astype(jnp.float32)
    y = y_ref[...].astype(jnp.float32)
    d = y - x
    r = d * d - y

    if apply_mask:
        # Zero rows that lie beyond the real data (partial trailing tile whose
        # out-of-bounds region is garbage, or duplicated clamped tiles).
        # jnp.where is garbage/NaN-safe.  Pure VPU work; free slack in a
        # mem-bound kernel, and compiled out when coverage is exact.
        tile_idx = c * steps_per_split + i
        local_row = jax.lax.broadcasted_iota(jnp.int32, (tile_rows, LANES), 0)
        valid = (tile_idx * tile_rows + local_row) < rows
        r = jnp.where(valid, r, 0.0)

    # (tile_rows, 128) -> (8, 128): each group of 8 rows is exactly one f32
    # vreg, so this is elementwise vreg adds on the VPU (no cross-lane work).
    partial = r.reshape(tile_rows // SUBLANES, SUBLANES, LANES).sum(axis=0)
    o_ref[...] += partial


def resolution_loss(x, y, *, tile_rows=4096, num_splits=2):
    """Mean of (y - x)**2 - y, computed in a Pallas TPU kernel."""
    assert x.shape == y.shape, "x and y must have the same shape"
    total_count = x.size
    out_dtype = jnp.promote_types(x.dtype, y.dtype)

    flat_x = x.reshape(-1)
    flat_y = y.reshape(-1)
    n = flat_x.shape[0]

    # Lane-align only when strictly necessary (<=127 zeros).  Padded zeros
    # contribute (0-0)**2 - 0 = 0 to the sum; we divide by the true element
    # count, so the mean is exact.  When n % 128 == 0 (common for image-style
    # tensors) the flatten + reshape below are free bitcasts: no extra HBM
    # traffic at all.
    if n % LANES != 0:
        flat_x = jnp.pad(flat_x, (0, LANES - n % LANES))
        flat_y = jnp.pad(flat_y, (0, LANES - n % LANES))

    rows = flat_x.shape[0] // LANES
    x2d = flat_x.reshape(rows, LANES)
    y2d = flat_y.reshape(rows, LANES)

    if rows < SUBLANES:
        # Tiny input (< 1024 elements): pad rows up to one vreg so the block
        # second-minor dim is a multiple of 8.  Negligible copy.
        x2d = jnp.pad(x2d, ((0, SUBLANES - rows), (0, 0)))
        y2d = jnp.pad(y2d, ((0, SUBLANES - rows), (0, 0)))
        rows = SUBLANES

    # Clamp block size to the data; keep it a multiple of 8 sublanes.
    tile_rows = max(SUBLANES, min(int(tile_rows), rows))
    tile_rows = (tile_rows // SUBLANES) * SUBLANES

    n_tiles = pl.cdiv(rows, tile_rows)
    splits = num_splits if n_tiles >= num_splits else 1   # v7x: 2 TCs
    steps = pl.cdiv(n_tiles, splits)
    coverage_rows = splits * steps * tile_rows
    apply_mask = coverage_rows > rows   # static: tail tiles need masking

    def in_index(c, i):
        # Clamp so a trailing out-of-range tile just re-reads the last valid
        # tile; the in-kernel mask zeroes its contribution.
        return (jnp.minimum(c * steps + i, n_tiles - 1), 0)

    kernel = functools.partial(
        _resolution_loss_kernel,
        tile_rows=tile_rows,
        rows=rows,
        steps_per_split=steps,
        apply_mask=apply_mask,
    )

    out = pl.pallas_call(
        kernel,
        out_shape=jax.ShapeDtypeStruct((splits * SUBLANES, LANES), jnp.float32),
        grid=(splits, steps),
        in_specs=[
            pl.BlockSpec((tile_rows, LANES), in_index),
            pl.BlockSpec((tile_rows, LANES), in_index),
        ],
        out_specs=pl.BlockSpec((SUBLANES, LANES), lambda c, i: (c, 0)),
        compiler_params=pltpu.CompilerParams(
            dimension_semantics=("parallel", "arbitrary"),
            vmem_limit_bytes=32 * 1024 * 1024,
        ),
    )(x2d, y2d)

    # Tiny final reduction (<= 2048 f32) + division by the true element count.
    return (jnp.sum(out) / jnp.float32(total_count)).astype(out_dtype)


if __name__ == "__main__":
    key = jax.random.PRNGKey(0)
    kx, ky = jax.random.split(key)
    # Small NCHW shapes consistent with an image-style loss: batch=2, C=4, 16x16.
    x = jax.random.normal(kx, (2, 4, 16, 16), dtype=jnp.float32)
    y = jax.random.normal(ky, (2, 4, 16, 16), dtype=jnp.float32)

    loss = resolution_loss(x, y)
    jax.block_until_ready(loss)
    ref = jnp.mean((y - x) ** 2 - y)
    assert jnp.allclose(loss, ref, rtol=1e-5, atol=1e-5), (loss, ref)

    # Multi-tile / 2-split path with masked + clamped duplicate tail tile.
    k1, k2, k3, k4, k5, k6, k7, k8 = jax.random.split(key, 8)
    xa = jax.random.normal(k1, (3, 4, 16, 16), dtype=jnp.float32)
    ya = jax.random.normal(k2, (3, 4, 16, 16), dtype=jnp.float32)
    la = resolution_loss(xa, ya, tile_rows=8)   # n_tiles=3, splits=2, masked
    assert jnp.allclose(la, jnp.mean((ya - xa) ** 2 - ya), rtol=1e-5, atol=1e-5)

    # Ragged size (not a multiple of 128): tiny lane-pad + partial OOB tile.
    xb = jax.random.normal(k3, (3, 5, 7, 11), dtype=jnp.float32)
    yb = jax.random.normal(k4, (3, 5, 7, 11), dtype=jnp.float32)
    lb = resolution_loss(xb, yb)
    assert jnp.allclose(lb, jnp.mean((yb - xb) ** 2 - yb), rtol=1e-5, atol=1e-5)

    # Multiple of 128 but not of 1024: zero-copy path with rows % 8 != 0
    # (partial out-of-bounds trailing tile masked in-kernel, no padding).
    xc = jax.random.normal(k5, (2, 5, 128), dtype=jnp.float32)
    yc = jax.random.normal(k6, (2, 5, 128), dtype=jnp.float32)
    lc = resolution_loss(xc, yc)
    assert jnp.allclose(lc, jnp.mean((yc - xc) ** 2 - yc), rtol=1e-5, atol=1e-5)

    # Tiny input (rows < 8): row-pad path.
    xd = jax.random.normal(k7, (2, 128), dtype=jnp.float32)
    yd = jax.random.normal(k8, (2, 128), dtype=jnp.float32)
    ld = resolution_loss(xd, yd)
    assert jnp.allclose(ld, jnp.mean((yd - xd) ** 2 - yd), rtol=1e-5, atol=1e-5)

    # bf16 inputs: narrow in HBM, f32 accumulation in-kernel, bf16 result.
    xe = x.astype(jnp.bfloat16)
    ye = y.astype(jnp.bfloat16)
    le = resolution_loss(xe, ye)
    ref_e = jnp.mean((ye.astype(jnp.float32) - xe.astype(jnp.float32)) ** 2
                     - ye.astype(jnp.float32))
    assert le.dtype == jnp.bfloat16
    assert jnp.allclose(le.astype(jnp.float32), ref_e, rtol=2e-2, atol=2e-2)

    print("KERNEL_OK")
</pallas_src>

<mosaic_0001>
module attributes {stable_mosaic.version = 11 : i64} {
  func.func @_resolution_loss_kernel(%arg0: i32, %arg1: i32, %arg2: memref<16x128xf32, #tpu.memory_space<vmem>>, %arg3: memref<16x128xf32, #tpu.memory_space<vmem>>, %arg4: memref<8x128xf32, #tpu.memory_space<vmem>>) attributes {dimension_semantics = [#tpu.dimension_semantics<parallel>, #tpu.dimension_semantics<arbitrary>], iteration_bounds = array<i64: 1, 1>, scalar_prefetch = 0 : i64, scratch_operands = 0 : i64, tpu.core_type = #tpu.core_type<tc>, window_params = [{transform_indices = @transform_0, window_bounds = array<i64: 16, 128>}, {transform_indices = @transform_1, window_bounds = array<i64: 16, 128>}, {transform_indices = @transform_2, window_bounds = array<i64: 8, 128>}]} {
    %c0_i32 = arith.constant 0 : i32
    %0 = arith.cmpi eq, %arg1, %c0_i32 : i32
    %1 = arith.extui %0 : i1 to i32
    %c0_i32_0 = arith.constant 0 : i32
    %2 = arith.cmpi ne, %1, %c0_i32_0 : i32
    scf.if %2 {
      %cst_8 = arith.constant 0.000000e+00 : f32
      %13 = vector.broadcast %cst_8 : f32 to vector<8x128xf32>
      %c0_9 = arith.constant 0 : index
      %c0_10 = arith.constant 0 : index
      %14 = vector.load %arg4[%c0_9, %c0_10] : memref<8x128xf32, #tpu.memory_space<vmem>>, vector<8x128xf32>
      tpu.vector_store %arg4[%c0_9, %c0_10], %13 {strides = array<i32>} : memref<8x128xf32, #tpu.memory_space<vmem>>, vector<8x128xf32>,
    } else {
    }
    %c0 = arith.constant 0 : index
    %c0_1 = arith.constant 0 : index
    %3 = vector.load %arg2[%c0, %c0_1] : memref<16x128xf32, #tpu.memory_space<vmem>>, vector<16x128xf32>
    %c0_2 = arith.constant 0 : index
    %c0_3 = arith.constant 0 : index
    %4 = vector.load %arg3[%c0_2, %c0_3] : memref<16x128xf32, #tpu.memory_space<vmem>>, vector<16x128xf32>
    %5 = arith.subf %4, %3 : vector<16x128xf32>
    %6 = arith.mulf %5, %5 : vector<16x128xf32>
    %7 = arith.subf %6, %4 : vector<16x128xf32>
    %8 = vector.shape_cast %7 : vector<16x128xf32> to vector<2x8x128xf32>
    %cst = arith.constant dense<0.000000e+00> : vector<8x128xf32>
    %9 = vector.multi_reduction <add>, %8, %cst [0] : vector<2x8x128xf32> to vector<8x128xf32>
    %c0_4 = arith.constant 0 : index
    %c0_5 = arith.constant 0 : index
    %10 = vector.load %arg4[%c0_4, %c0_5] : memref<8x128xf32, #tpu.memory_space<vmem>>, vector<8x128xf32>
    %11 = arith.addf %10, %9 : vector<8x128xf32>
    %c0_6 = arith.constant 0 : index
    %c0_7 = arith.constant 0 : index
    %12 = vector.load %arg4[%c0_6, %c0_7] : memref<8x128xf32, #tpu.memory_space<vmem>>, vector<8x128xf32>
    tpu.vector_store %arg4[%c0_6, %c0_7], %11 {strides = array<i32>} : memref<8x128xf32, #tpu.memory_space<vmem>>, vector<8x128xf32>,
    return
  }
  func.func @transform_0(%arg0: i32, %arg1: i32) -> (i32, i32) {
    %c1_i32 = arith.constant 1 : i32
    %0 = arith.muli %arg0, %c1_i32 : i32
    %1 = arith.addi %0, %arg1 : i32
    %c0_i32 = arith.constant 0 : i32
    %2 = arith.minsi %1, %c0_i32 : i32
    %c0_i32_0 = arith.constant 0 : i32
    %c0_i32_1 = arith.constant 0 : i32
    return %2, %c0_i32_0 : i32, i32
  }
  func.func @transform_1(%arg0: i32, %arg1: i32) -> (i32, i32) {
    %c1_i32 = arith.constant 1 : i32
    %0 = arith.muli %arg0, %c1_i32 : i32
    %1 = arith.addi %0, %arg1 : i32
    %c0_i32 = arith.constant 0 : i32
    %2 = arith.minsi %1, %c0_i32 : i32
    %c0_i32_0 = arith.constant 0 : i32
    %c0_i32_1 = arith.constant 0 : i32
    return %2, %c0_i32_0 : i32, i32
  }
  func.func @transform_2(%arg0: i32, %arg1: i32) -> (i32, i32) {
    %c0_i32 = arith.constant 0 : i32
    %c0_i32_0 = arith.constant 0 : i32
    return %arg0, %c0_i32 : i32, i32
  }
}

</mosaic_0001>

<llo_original>
// kernel: tpu_custom_call.1
$region0: #{tpu_custom_call.1}
  #allocation0 [shape = 'u32[]', space=smem, size = 0x4, offset = 0x4, fixed_abs, tag = 'smem constant byte address 0x4 - core index']
  #allocation1 [shape = 'u32[72,128]{1,0:T(1,128)}', space=vmem, size = 0x9000, scoped, tag = 'internal scratch']
  %s0 = inlined_call_operand.hbm [shape: f32[16,128], index: 0, kind: input, shape index: {}]
  %s1 = inlined_call_operand.hbm [shape: f32[16,128], index: 1, kind: input, shape index: {}]
  %s2 = inlined_call_operand.hbm [shape: f32[8,128], index: 2, kind: output, shape index: {}]
  %s3 = sld [smem:[#allocation0]]
  $region30: #{tpu_custom_call.1} parent=0
    _
  %s5 = ssub.s32 1, %s3
  %s6 = scalar_select 0, %s5, %s3
  $region1: #{tpu_custom_call.1} parent=0
    #allocation2 [shape = 'u8[8192]{0}', space=vmem, size = 0x2000, scoped, tag = 'input window, operand 0, single buffered']
    #allocation3 [shape = 's32[1]{0}', space=sflag, size = 0x4, scoped, tag = 'scoped memory for tpu_custom_call.1']
    #allocation4 [shape = 's32[1]{0}', space=sflag, size = 0x4, scoped, tag = 'scoped memory for tpu_custom_call.1']
    #allocation5 [shape = 'u8[8192]{0}', space=vmem, size = 0x2000, scoped, tag = 'input window, operand 1, single buffered']
    #allocation6 [shape = 's32[1]{0}', space=sflag, size = 0x4, scoped, tag = 'scoped memory for tpu_custom_call.1']
    #allocation7 [shape = 'u8[4096]{0}', space=vmem, size = 0x1000, scoped, tag = 'output window, operand 0, single buffered']
    %7 = vsyncpa [#allocation3], 0
    %8 = vsyncpa [#allocation6], 0
    %9 = vsyncpa [#allocation4], 0
    // Predicated region
    $region2: #{tpu_custom_call.1} parent=1 // pred_check
      _
    $region3: #{tpu_custom_call.1} parent=1 // pred_check_branch
      %11 = sbr.rel (0) target = $region5
    $region4: #{tpu_custom_call.1} parent=1 // pred_region
      %s12 = sadd.s32 0, 0
      %p13 = scmp.lt.s32.totalorder %s12, 0
      %s14 = scalar_select %p13, %s12, 0
      %s15 = smul.u32 2, %s14
      %17 = vsyncadd [#allocation3], 0
      %s18 = smul.addr %s15, 8
      %s19 = scalar_lea.hbm %s0, %s18
      %s20 = sshll.u32 %s19, 4
      %s21 = int_to_ptr.hbm [resolvable:$true] %s20
      %s22 = sshll.u32 [#allocation2], 4
      %s23 = int_to_ptr.vmem [resolvable:$true] %s22
      %28 = dma.hbm_to_vmem [thread:$0]  %s21, 256, %s23, [#allocation3], 128, 128, 8
    $region5: #{tpu_custom_call.1} parent=1 // pred_fallthru
      _
    // Predicated region
    $region6: #{tpu_custom_call.1} parent=1 // pred_check
      _
    $region7: #{tpu_custom_call.1} parent=1 // pred_check_branch
      %30 = sbr.rel (0) target = $region9
    $region8: #{tpu_custom_call.1} parent=1 // pred_region
      %s31 = sadd.s32 0, 0
      %p32 = scmp.lt.s32.totalorder %s31, 0
      %s33 = scalar_select %p32, %s31, 0
      %s34 = smul.u32 2, %s33
      %36 = vsyncadd [#allocation6], 0
      %s37 = smul.addr %s34, 8
      %s38 = scalar_lea.hbm %s1, %s37
      %s39 = sshll.u32 %s38, 4
      %s40 = int_to_ptr.hbm [resolvable:$true] %s39
      %s41 = sshll.u32 [#allocation5], 4
      %s42 = int_to_ptr.vmem [resolvable:$true] %s41
      %47 = dma.hbm_to_vmem [thread:$0]  %s40, 256, %s42, [#allocation6], 128, 128, 8
    $region9: #{tpu_custom_call.1} parent=1 // pred_fallthru
      _
    // Predicated region
    $region10: #{tpu_custom_call.1} parent=1 // pred_check
      _
    $region11: #{tpu_custom_call.1} parent=1 // pred_check_branch
      %49 = sbr.rel (0) target = $region13
    $region12: #{tpu_custom_call.1} parent=1 // pred_region
      %51 = dma.done [#allocation3], 256
    $region13: #{tpu_custom_call.1} parent=1 // pred_fallthru
      _
    // Predicated region
    $region14: #{tpu_custom_call.1} parent=1 // pred_check
      _
    $region15: #{tpu_custom_call.1} parent=1 // pred_check_branch
      %53 = sbr.rel (0) target = $region17
    $region16: #{tpu_custom_call.1} parent=1 // pred_region
      %55 = dma.done [#allocation6], 256
    $region17: #{tpu_custom_call.1} parent=1 // pred_fallthru
      _
    %s56 = sadd.s32 0, 0
    %p57 = scmp.lt.s32.totalorder %s56, 0
    %s58 = scalar_select %p57, %s56, 0
    %s59 = smul.u32 2, %s58
    %s60 = sadd.s32 0, 0
    %p61 = scmp.lt.s32.totalorder %s60, 0
    %s62 = scalar_select %p61, %s60, 0
    %s63 = smul.u32 2, %s62
    %p64 = scmp.eq.s32.totalorder 0, 0
    // Predicated region
    $region18: #{tpu_custom_call.1} parent=1 // pred_check
      %p65 = pneg %p64
    $region19: #{tpu_custom_call.1} parent=1 // pred_check_branch
      %67 = sbr.rel (%p65) target = $region21
    $region20: #{tpu_custom_call.1} parent=1 // pred_region
      %68 = vst [vmem:[#allocation7] sm:$0xff] 0.0
    $region21: #{tpu_custom_call.1} parent=1 // pred_fallthru
      _
    %v69 = vld [vmem:[#allocation2] sm:$0xff]
    %v70 = vld [vmem:[#allocation2 + $0x8] sm:$0xff]
    %v71 = vld [vmem:[#allocation5] sm:$0xff]
    %v72 = vld [vmem:[#allocation5 + $0x8] sm:$0xff]
    %v73 = vsub.f32 %v71, %v69
    %v74 = vsub.f32 %v72, %v70
    %v75 = vmul.f32 %v73, %v73
    %v76 = vmul.f32 %v74, %v74
    %v77 = vsub.f32 %v75, %v71
    %v78 = vsub.f32 %v76, %v72
    %v79 = vadd.f32 %v77, %v78
    %v80 = vld [vmem:[#allocation7] sm:$0xff]
    %v81 = vadd.f32 %v80, %v79
    %82 = vst [vmem:[#allocation7] sm:$0xff] %v81
    // Predicated region
    $region22: #{tpu_custom_call.1} parent=1 // pred_check
      _
    $region23: #{tpu_custom_call.1} parent=1 // pred_check_branch
      %84 = sbr.rel (0) target = $region25
    $region24: #{tpu_custom_call.1} parent=1 // pred_region
      %86 = vsyncadd [#allocation4], 0
      %s88 = sshll.u32 [#allocation7], 4
      %s89 = int_to_ptr.vmem [resolvable:$true] %s88
      %s90 = sshll.u32 %s2, 4
      %s91 = int_to_ptr.hbm [resolvable:$true] %s90
      %93 = dma.vmem_to_hbm [thread:$0]  %s89, 128, %s91, [#allocation4]
    $region25: #{tpu_custom_call.1} parent=1 // pred_fallthru
      _
    // Predicated region
    $region26: #{tpu_custom_call.1} parent=1 // pred_check
      _
    $region27: #{tpu_custom_call.1} parent=1 // pred_check_branch
      %95 = sbr.rel (0) target = $region29
    $region28: #{tpu_custom_call.1} parent=1 // pred_region
      %97 = dma.done [#allocation4], 128
    $region29: #{tpu_custom_call.1} parent=1 // pred_fallthru
      _
    %98 = vsyncpa [#allocation3], 1
    %99 = vsyncpa [#allocation6], 1
    %100 = vsyncpa [#allocation4], 1

</llo_original>
